<compile_context>
chip_gen: v7x
topology: tpu7x:2x2x1
jax: 0.10.0
libtpu: 0.0.40
codegen_flags: <defaults>
</compile_context>

<pallas_src>
import jax
import jax.numpy as jnp
from jax.experimental import pallas as pl
from jax.experimental.pallas import tpu as pltpu


def _lambda_sign_kernel(x_ref, o_ref):
    x = x_ref[...]
    one = jnp.ones((), dtype=o_ref.dtype)
    # lambd: -1 where x < 0, else +1 (x == 0 / -0.0 / NaN map to +1, matching Python `else`)
    o_ref[...] = jnp.where(x < 0, -one, one)


_LANE_CANDIDATES = (4096, 2048, 1024, 512, 256, 128)
_MIN_SPLIT_BLOCK_BYTES = 1 * 1024 * 1024  # keep megacore blocks >= ~1 MiB


def _chip_profile():
    """(num_tensorcores, block_bytes_cap, vmem_limit_bytes) for the local chip.

    Defaults to the single-TC / 4 MiB / 32 MiB profile (safe on every
    generation); upgrades to the megacore profile only if a v7x-class device
    is detected.
    """
    num_tc = 1
    block_cap = 4 * 1024 * 1024
    vmem_limit = 32 * 1024 * 1024
    try:
        kind = jax.devices()[0].device_kind.lower()
    except Exception:  # pragma: no cover - defensive; never fail the kernel on detection
        kind = ""
    if "v7" in kind:
        num_tc = 2
        block_cap = 8 * 1024 * 1024
        vmem_limit = 40 * 1024 * 1024
    return num_tc, block_cap, vmem_limit


def _native_sublane(dtype) -> int:
    # 8 for 4-byte, 16 for 2-byte, 32 for 1-byte dtypes.
    itemsize = jnp.dtype(dtype).itemsize
    return max(8, 32 // itemsize)


def _run_2d(x2d: jax.Array) -> jax.Array:
    rows, lane = x2d.shape
    itemsize = jnp.dtype(x2d.dtype).itemsize
    sublane = _native_sublane(x2d.dtype)
    num_tc, block_cap, vmem_limit = _chip_profile()

    # Largest row-tile that keeps one block under the byte cap, rounded to the
    # dtype-native sublane multiple.
    tm_max = max(sublane, (block_cap // (lane * itemsize)) // sublane * sublane)

    if rows > tm_max:
        # Big input: cap-sized blocks; plenty of grid steps for either 1 or 2 TCs.
        tm = tm_max
    elif num_tc > 1 and rows >= 2 * sublane:
        # Megacore: aim for >=4 grid steps (>=2 blocks per TC) so writeback of
        # block i-1 overlaps the prefetch of block i; fall back to 2 steps if
        # 4 would push blocks below ~1 MiB.
        total_bytes = rows * lane * itemsize
        steps = 4 if total_bytes >= 4 * _MIN_SPLIT_BLOCK_BYTES else 2
        tm = max(sublane, (rows // steps) // sublane * sublane)
    else:
        # Single-TC chip (or tiny input): one full-extent block, no step tax.
        tm = rows

    grid = (pl.cdiv(rows, tm),)

    return pl.pallas_call(
        _lambda_sign_kernel,
        out_shape=jax.ShapeDtypeStruct((rows, lane), x2d.dtype),
        grid_spec=pltpu.PrefetchScalarGridSpec(
            num_scalar_prefetch=0,
            grid=grid,
            in_specs=[pl.BlockSpec((tm, lane), lambda i: (i, 0))],
            out_specs=pl.BlockSpec((tm, lane), lambda i: (i, 0)),
        ),
        compiler_params=pltpu.CompilerParams(
            dimension_semantics=("parallel",),
            vmem_limit_bytes=vmem_limit,
        ),
    )(x2d)


def lambda_layer(x: jax.Array) -> jax.Array:
    """Applies lambd elementwise via a Pallas TPU kernel. Works for any shape/float dtype."""
    orig_shape = x.shape
    flat = x.reshape(-1)  # reshape of a contiguous array: metadata only, no HBM copy
    n = flat.shape[0]

    if n == 0:
        return x

    main_n = (n // 128) * 128
    if main_n == 0:
        # Fewer than one vreg lane-row of data: not worth a kernel launch.
        one = jnp.ones((), dtype=x.dtype)
        return jnp.where(x < 0, -one, one)

    # Largest lane width (multiple of 128) dividing the 128-aligned prefix.
    lane = next(l for l in _LANE_CANDIDATES if main_n % l == 0)
    main = flat[:main_n].reshape(main_n // lane, lane)
    main_out = _run_2d(main).reshape(-1)

    if main_n == n:
        return main_out.reshape(orig_shape)

    # Ragged tail (< 128 elements): plain select, stitched with a single concat
    # (no full-array pad / slice round-trips).
    tail = flat[main_n:]
    one = jnp.ones((), dtype=tail.dtype)
    tail_out = jnp.where(tail < 0, -one, one)
    return jnp.concatenate([main_out, tail_out]).reshape(orig_shape)


if __name__ == "__main__":
    key = jax.random.PRNGKey(0)

    # NCHW input consistent with the conv pipeline this layer lives in.
    x = jax.random.normal(key, (2, 4, 16, 16), dtype=jnp.float32)
    y = jax.block_until_ready(lambda_layer(x))
    ref = jnp.where(x < 0, -1.0, 1.0)
    assert y.shape == x.shape and y.dtype == x.dtype
    assert bool(jnp.all(y == ref))

    # Exercise the ragged (prefix + tail) path as well.
    x2 = jax.random.normal(jax.random.PRNGKey(1), (3, 5, 7, 9), dtype=jnp.float32)
    y2 = jax.block_until_ready(lambda_layer(x2))
    ref2 = jnp.where(x2 < 0, -1.0, 1.0)
    assert y2.shape == x2.shape and y2.dtype == x2.dtype
    assert bool(jnp.all(y2 == ref2))

    # bf16 path (checks dtype-native sublane rounding / native-dtype select).
    x3 = jax.random.normal(jax.random.PRNGKey(2), (2, 4, 16, 16), dtype=jnp.bfloat16)
    y3 = jax.block_until_ready(lambda_layer(x3))
    ref3 = jnp.where(x3 < 0, jnp.asarray(-1, jnp.bfloat16), jnp.asarray(1, jnp.bfloat16))
    assert y3.shape == x3.shape and y3.dtype == x3.dtype
    assert bool(jnp.all(y3 == ref3))

    print("KERNEL_OK")
</pallas_src>

<mosaic_0001>
module attributes {stable_mosaic.version = 11 : i64} {
  func.func @_lambda_sign_kernel(%arg0: i32, %arg1: memref<1x2048xf32, #tpu.memory_space<vmem>>, %arg2: memref<1x2048xf32, #tpu.memory_space<vmem>>) attributes {dimension_semantics = [#tpu.dimension_semantics<parallel>], iteration_bounds = array<i64: 1>, scalar_prefetch = 0 : i64, scratch_operands = 0 : i64, tpu.core_type = #tpu.core_type<tc>, window_params = [{transform_indices = @transform_0, window_bounds = array<i64: 1, 2048>}, {transform_indices = @transform_1, window_bounds = array<i64: 1, 2048>}]} {
    %c0 = arith.constant 0 : index
    %c0_0 = arith.constant 0 : index
    %0 = vector.load %arg1[%c0, %c0_0] : memref<1x2048xf32, #tpu.memory_space<vmem>>, vector<1x2048xf32>
    %cst = arith.constant 0.000000e+00 : f32
    %1 = vector.broadcast %cst : f32 to vector<1x2048xf32>
    %2 = arith.cmpf olt, %0, %1 : vector<1x2048xf32>
    %cst_1 = arith.constant 0.000000e+00 : f32
    %cst_2 = arith.constant 1.000000e+00 : f32
    %3 = arith.subf %cst_1, %cst_2 : f32
    %cst_3 = arith.constant 1.000000e+00 : f32
    %4 = vector.broadcast %3 : f32 to vector<1x2048xf32>
    %5 = vector.broadcast %cst_3 : f32 to vector<1x2048xf32>
    %6 = arith.select %2, %4, %5 : vector<1x2048xi1>, vector<1x2048xf32>
    %c0_4 = arith.constant 0 : index
    %c0_5 = arith.constant 0 : index
    %7 = vector.load %arg2[%c0_4, %c0_5] : memref<1x2048xf32, #tpu.memory_space<vmem>>, vector<1x2048xf32>
    tpu.vector_store %arg2[%c0_4, %c0_5], %6 {strides = array<i32>} : memref<1x2048xf32, #tpu.memory_space<vmem>>, vector<1x2048xf32>,
    return
  }
  func.func @transform_0(%arg0: i32) -> (i32, i32) {
    %c0_i32 = arith.constant 0 : i32
    %c0_i32_0 = arith.constant 0 : i32
    return %arg0, %c0_i32 : i32, i32
  }
  func.func @transform_1(%arg0: i32) -> (i32, i32) {
    %c0_i32 = arith.constant 0 : i32
    %c0_i32_0 = arith.constant 0 : i32
    return %arg0, %c0_i32 : i32, i32
  }
}

</mosaic_0001>

<llo_original>
// kernel: tpu_custom_call.1
$region0: #{tpu_custom_call.1}
  #allocation0 [shape = 'u32[]', space=smem, size = 0x4, offset = 0x4, fixed_abs, tag = 'smem constant byte address 0x4 - core index']
  #allocation1 [shape = 'u32[144,128]{1,0:T(1,128)}', space=vmem, size = 0x12000, scoped, tag = 'internal scratch']
  %s0 = inlined_call_operand.hbm [shape: f32[1,2048], index: 0, kind: input, shape index: {}]
  %s1 = inlined_call_operand.hbm [shape: f32[1,2048], index: 1, kind: output, shape index: {}]
  %s2 = sld [smem:[#allocation0]]
  $region18: #{tpu_custom_call.1} parent=0
    _
  %s4 = ssub.s32 1, %s2
  %s5 = scalar_select 0, %s4, %s2
  $region1: #{tpu_custom_call.1} parent=0
    #allocation2 [shape = 'u8[8192]{0}', space=vmem, size = 0x2000, scoped, tag = 'input window, operand 0, single buffered']
    #allocation3 [shape = 's32[1]{0}', space=sflag, size = 0x4, scoped, tag = 'scoped memory for tpu_custom_call.1']
    #allocation4 [shape = 's32[1]{0}', space=sflag, size = 0x4, scoped, tag = 'scoped memory for tpu_custom_call.1']
    #allocation5 [shape = 'u8[8192]{0}', space=vmem, size = 0x2000, scoped, tag = 'output window, operand 0, single buffered']
    %6 = vsyncpa [#allocation3], 0
    %7 = vsyncpa [#allocation4], 0
    // Predicated region
    $region2: #{tpu_custom_call.1} parent=1 // pred_check
      _
    $region3: #{tpu_custom_call.1} parent=1 // pred_check_branch
      %9 = sbr.rel (0) target = $region5
    $region4: #{tpu_custom_call.1} parent=1 // pred_region
      %s11 = ssub.s32 256, 256
      %12 = vsyncadd [#allocation3], %s11
      %s14 = sshll.u32 [#allocation2], 4
      %s15 = int_to_ptr.vmem [resolvable:$true] %s14
      %17 = dma.hbm_to_vmem [thread:$0]  %s0, 256, %s15, [#allocation3]
    $region5: #{tpu_custom_call.1} parent=1 // pred_fallthru
      _
    // Predicated region
    $region6: #{tpu_custom_call.1} parent=1 // pred_check
      _
    $region7: #{tpu_custom_call.1} parent=1 // pred_check_branch
      %19 = sbr.rel (0) target = $region9
    $region8: #{tpu_custom_call.1} parent=1 // pred_region
      %20 = dma.done [#allocation3], 256
    $region9: #{tpu_custom_call.1} parent=1 // pred_fallthru
      _
    %v21 = vld [vmem:[#allocation2] sm:$0xff]
    %v22 = vld [vmem:[#allocation2 + $0x8] sm:$0xff]
    %vm23 = vcmp.lt.f32.partialorder %v21, 0.0
    %vm24 = vcmp.lt.f32.partialorder %v22, 0.0
    %v25 = vsel %vm23, -1.0, 1.0
    %v26 = vsel %vm24, -1.0, 1.0
    %27 = vst [vmem:[#allocation5] sm:$0xff] %v25
    %28 = vst [vmem:[#allocation5 + $0x8] sm:$0xff] %v26
    // Predicated region
    $region10: #{tpu_custom_call.1} parent=1 // pred_check
      _
    $region11: #{tpu_custom_call.1} parent=1 // pred_check_branch
      %30 = sbr.rel (0) target = $region13
    $region12: #{tpu_custom_call.1} parent=1 // pred_region
      %s32 = ssub.s32 256, 256
      %33 = vsyncadd [#allocation4], %s32
      %s35 = sshll.u32 [#allocation5], 4
      %s36 = int_to_ptr.vmem [resolvable:$true] %s35
      %38 = dma.vmem_to_hbm [thread:$0]  %s36, 256, %s1, [#allocation4]
    $region13: #{tpu_custom_call.1} parent=1 // pred_fallthru
      _
    // Predicated region
    $region14: #{tpu_custom_call.1} parent=1 // pred_check
      _
    $region15: #{tpu_custom_call.1} parent=1 // pred_check_branch
      %40 = sbr.rel (0) target = $region17
    $region16: #{tpu_custom_call.1} parent=1 // pred_region
      %41 = dma.done [#allocation4], 256
    $region17: #{tpu_custom_call.1} parent=1 // pred_fallthru
      _
    %42 = vsyncpa [#allocation3], 1
    %43 = vsyncpa [#allocation4], 1

</llo_original>
